<compile_context>
chip_gen: v7x
topology: tpu7x:2x2x1
jax: 0.10.0
libtpu: 0.0.40
codegen_flags: <defaults>
</compile_context>

<pallas_src>
import functools

import numpy as np
import jax
import jax.numpy as jnp
from jax.experimental import pallas as pl
from jax.experimental.pallas import tpu as pltpu

N_RAW = 203            # raw input features: 193 non-categorical + 10 champion ids
N_NONCAT = 193
EMB_DIM = 8
N_CHAMP = 10
N_EMB_FLAT = N_CHAMP * EMB_DIM          # 80
N_FINAL = N_NONCAT + N_EMB_FLAT         # 273 (matches Linear(273, 128))
HID = 128
NUM_EMB = 171
BN_EPS = 1e-5

TILE_B_MAX = 4096      # batch tile: >=1024 rows ~86% of HBM roofline; double-
                       # buffered bf16 input footprint ~1.1 KB/row.
FUSED_MAX_B = 32768    # fused path keeps f32 h in VMEM (512 B/row): 16 MiB max,
                       # fits v7x's 64 MiB physical VMEM with headroom.
VMEM_LIMIT_BYTES = 40 * 1024 * 1024   # above the 16 MiB (v5e) / 32 MiB (v6e/v7x)
                                      # scoped defaults; < physical on all gens.

CHAMPION_INDICES = np.array([0, 12, 24, 36, 48, 101, 113, 125, 137, 149])

# Indices below address x_non_cat (AFTER the 10 champion columns are removed),
# exactly as in the reference `normalize`.
KILL        = [0, 11, 22, 33, 44, 96, 107, 118, 129, 140]
DEATH       = [1, 12, 23, 34, 45, 97, 108, 119, 130, 141]
ASSIST      = [2, 13, 24, 35, 46, 98, 109, 120, 131, 142]
GOLD        = [6, 17, 28, 39, 50, 102, 113, 124, 135, 146]
CS          = [8, 19, 30, 41, 52, 104, 115, 126, 137, 148]
BARON       = [3, 14, 25, 36, 47, 99, 110, 121, 132, 143]
ELDER       = [4, 15, 26, 37, 48, 100, 111, 122, 133, 144]
DEATH_TIMER = [5, 16, 27, 38, 49, 101, 112, 123, 134, 145]
LEVEL       = [7, 18, 29, 40, 51, 103, 114, 125, 136, 147]
X_IDX       = [9, 20, 31, 42, 53, 105, 116, 127, 138, 149]
Y_IDX       = [10, 21, 32, 43, 54, 106, 117, 128, 139, 150]

NON_CHAMP_MASK = np.ones(N_RAW, dtype=bool)
NON_CHAMP_MASK[CHAMPION_INDICES] = False
NON_CHAMP_IDX = np.nonzero(NON_CHAMP_MASK)[0]   # 193 columns, order preserved


def _build_norm_scale_shift():
    """Fold the sequential in-place normalizations into per-column (scale, shift)."""
    scale = np.ones(N_NONCAT, dtype=np.float32)
    shift = np.zeros(N_NONCAT, dtype=np.float32)

    def affine(idx, mean, std):
        scale[idx] = 1.0 / std
        shift[idx] = -mean / std

    affine(KILL, 2.686, 3.281)
    affine(DEATH, 2.698, 2.754)
    affine(ASSIST, 3.259, 4.216)
    affine(GOLD, 5840.304, 4262.559)
    affine(CS, 88.101, 74.53)
    scale[BARON] = 1.0 / (3 * 60)
    scale[ELDER] = 1.0 / (2 * 60 + 30)
    scale[DEATH_TIMER] = 1.0 / 79.0
    scale[LEVEL] = 1.0 / 18.0
    scale[X_IDX] = 1.0 / 14500.0
    scale[Y_IDX] = 1.0 / 14500.0
    scale[N_NONCAT - 1] = 1.0 / 30.0          # x_non_cat[:, -1] /= 30
    return scale, shift


NORM_SCALE_NP, NORM_SHIFT_NP = _build_norm_scale_shift()


def init_params(key):
    """Deterministic parameter init (shapes from DNN.__init__)."""
    k_emb, k_w1, k_w2, k_b2 = jax.random.split(key, 4)
    emb = jax.random.normal(k_emb, (NUM_EMB, EMB_DIM), jnp.float32)         # Embedding(171, 8)
    b1 = 1.0 / np.sqrt(N_FINAL)
    w1 = jax.random.uniform(k_w1, (N_FINAL, HID), jnp.float32, -b1, b1)     # Linear(273,128,no bias)
    gamma = jnp.ones((1, HID), jnp.float32)                                 # BatchNorm1d(128) weight
    beta = jnp.zeros((1, HID), jnp.float32)                                 # BatchNorm1d(128) bias
    b2b = 1.0 / np.sqrt(HID)
    w2 = jax.random.uniform(k_w2, (HID, 1), jnp.float32, -b2b, b2b)         # Linear(128,1) weight^T
    b2 = jax.random.uniform(k_b2, (1, 1), jnp.float32, -b2b, b2b)           # Linear(128,1) bias
    return dict(emb=emb, w1=w1, gamma=gamma, beta=beta, w2=w2, b2=b2)


def prepare_params(params):
    """One-time parameter prep: fold normalization + column mask into fc1, cast bf16."""
    scale = jnp.asarray(NORM_SCALE_NP)                   # [193]
    shift = jnp.asarray(NORM_SHIFT_NP)                   # [193]
    w1 = params["w1"]                                    # [273, 128] f32
    w1_nc = scale[:, None] * w1[:N_NONCAT]               # [193, 128] normalized fc1 rows
    # Scatter to raw-column positions; zero rows at the 10 champion columns, so
    # raw x feeds the MXU directly (no [B,193] masked intermediate).
    w1a = jnp.zeros((N_RAW, HID), jnp.float32).at[jnp.asarray(NON_CHAMP_IDX)].set(w1_nc)
    w1a = w1a.astype(jnp.bfloat16)                                  # [203, 128] bf16
    w1b = w1[N_NONCAT:].astype(jnp.bfloat16)                        # [80, 128]  bf16
    b1 = (shift[None, :] @ w1[:N_NONCAT]).astype(jnp.float32)       # [1, 128]   f32
    # fc2 weight as a lane row, zero-padded to 8 sublanes (only row 0 is real)
    w2_row = params["w2"].reshape(1, HID).astype(jnp.float32)
    w2_pad = jnp.concatenate([w2_row, jnp.zeros((7, HID), jnp.float32)], axis=0)
    return dict(
        emb=params["emb"].astype(jnp.bfloat16),
        w1a=w1a, w1b=w1b, b1=b1,
        gamma=params["gamma"].astype(jnp.float32),
        beta=params["beta"].astype(jnp.float32),
        w2_pad=w2_pad,
        b2=params["b2"].astype(jnp.float32),
    )


def _forward_fused(x_bf, emb_flat, pp, B, tile_b, num_tiles, b_pad):
    """Single pallas_call: fc1 + BN stats (phase 0), BN finalize + ReLU + fc2 (phase 1).

    h never touches HBM: it lives in a persistent f32 VMEM scratch.
    """

    def kernel(x_ref, e_ref, w1a_ref, w1b_ref, b1_ref, g_ref, bt_ref, w2_ref, b2_ref,
               o_ref, h_vmem, ssum, ssq, bn_sc, bn_sh):
        p = pl.program_id(0)   # phase
        i = pl.program_id(1)   # batch tile

        @pl.when(p == 0)
        def _fc1_and_stats():
            @pl.when(i == 0)
            def _():
                ssum[...] = jnp.zeros_like(ssum)
                ssq[...] = jnp.zeros_like(ssq)

            h = (jnp.dot(x_ref[...], w1a_ref[...], preferred_element_type=jnp.float32)
                 + jnp.dot(e_ref[...], w1b_ref[...], preferred_element_type=jnp.float32)
                 + b1_ref[...])                                      # [tile_b, 128] f32

            if b_pad != B:   # mask zero-padded rows out of the batch statistics
                row = jax.lax.broadcasted_iota(jnp.int32, (tile_b, 1), 0) + i * tile_b
                hm = jnp.where(row < B, h, 0.0)
            else:
                hm = h
            ssum[...] += jnp.sum(hm, axis=0, keepdims=True)
            ssq[...] += jnp.sum(hm * hm, axis=0, keepdims=True)

            h_vmem[i] = h                                            # stays in VMEM (f32)

        @pl.when(p == 1)
        def _bn_relu_fc2():
            @pl.when(i == 0)
            def _():   # BN finalize at the phase boundary (training-mode batch stats)
                mean = ssum[...] * (1.0 / B)
                var = ssq[...] * (1.0 / B) - mean * mean             # biased variance
                inv = jax.lax.rsqrt(var + BN_EPS)
                sc = g_ref[...] * inv
                bn_sc[...] = sc
                bn_sh[...] = bt_ref[...] - mean * sc

            r = jnp.maximum(h_vmem[i] * bn_sc[...] + bn_sh[...], 0.0)   # [tile_b, 128]
            out = jax.lax.dot_general(                               # [8, tile_b]; row 0 real
                w2_ref[...], r, (((1,), (1,)), ((), ())),
                preferred_element_type=jnp.float32)
            o_ref[...] = out[0:1, :] + b2_ref[...]                   # lane-dense (1, tile_b)

    # During phase 1 the batch inputs are not needed: point their index_map at
    # the last phase-0 block so no extra DMA is issued (index unchanged).
    last = num_tiles - 1
    batch_map = lambda p, i: ((1 - p) * i + p * last, 0)
    const_map = lambda p, i: (0, 0)

    return pl.pallas_call(
        kernel,
        out_shape=jax.ShapeDtypeStruct((1, b_pad), jnp.float32),
        grid=(2, num_tiles),
        in_specs=[
            pl.BlockSpec((tile_b, N_RAW), batch_map),
            pl.BlockSpec((tile_b, N_EMB_FLAT), batch_map),
            pl.BlockSpec((N_RAW, HID), const_map),
            pl.BlockSpec((N_EMB_FLAT, HID), const_map),
            pl.BlockSpec((1, HID), const_map),
            pl.BlockSpec((1, HID), const_map),
            pl.BlockSpec((1, HID), const_map),
            pl.BlockSpec((8, HID), const_map),
            pl.BlockSpec((1, 1), const_map),
        ],
        # phase 0 keeps block (0,0) resident (never written, never flushed);
        # phase 1 writes block (0,i).
        out_specs=pl.BlockSpec((1, tile_b), lambda p, i: (0, p * i)),
        scratch_shapes=[
            pltpu.VMEM((num_tiles, tile_b, HID), jnp.float32),   # persistent h
            pltpu.VMEM((1, HID), jnp.float32),                   # sum(h)
            pltpu.VMEM((1, HID), jnp.float32),                   # sum(h^2)
            pltpu.VMEM((1, HID), jnp.float32),                   # bn scale
            pltpu.VMEM((1, HID), jnp.float32),                   # bn shift
        ],
        compiler_params=pltpu.CompilerParams(
            dimension_semantics=("arbitrary", "arbitrary"),
            vmem_limit_bytes=VMEM_LIMIT_BYTES),
    )(x_bf, emb_flat, pp["w1a"], pp["w1b"], pp["b1"],
      pp["gamma"], pp["beta"], pp["w2_pad"], pp["b2"])


def _forward_two_pass(x_bf, emb_flat, pp, B, tile_b, num_tiles, b_pad):
    """Large-batch fallback: h round-trips HBM as bf16, BN stats are per-tile
    partials so the batch axis is 'parallel' (sharded across v7x TensorCores)."""

    def p1_kernel(x_ref, e_ref, w1a_ref, w1b_ref, b1_ref, h_ref, ssum_ref, ssq_ref):
        i = pl.program_id(0)
        h = (jnp.dot(x_ref[...], w1a_ref[...], preferred_element_type=jnp.float32)
             + jnp.dot(e_ref[...], w1b_ref[...], preferred_element_type=jnp.float32)
             + b1_ref[...])                                          # [tile_b, 128] f32
        hb = h.astype(jnp.bfloat16)
        hs = hb.astype(jnp.float32)          # stats on exactly what phase 2 will read
        if b_pad != B:
            row = jax.lax.broadcasted_iota(jnp.int32, (tile_b, 1), 0) + i * tile_b
            hs = jnp.where(row < B, hs, 0.0)
        part_sum = jnp.sum(hs, axis=0, keepdims=True)                # [1, 128]
        part_sq = jnp.sum(hs * hs, axis=0, keepdims=True)
        # partial-stat blocks are (1, 8, 128); only sublane 0 is meaningful
        ssum_ref[...] = jnp.broadcast_to(part_sum, (8, HID)).reshape(1, 8, HID)
        ssq_ref[...] = jnp.broadcast_to(part_sq, (8, HID)).reshape(1, 8, HID)
        h_ref[...] = hb

    h, ssum, ssq = pl.pallas_call(
        p1_kernel,
        out_shape=(jax.ShapeDtypeStruct((b_pad, HID), jnp.bfloat16),
                   jax.ShapeDtypeStruct((num_tiles, 8, HID), jnp.float32),
                   jax.ShapeDtypeStruct((num_tiles, 8, HID), jnp.float32)),
        grid=(num_tiles,),
        in_specs=[
            pl.BlockSpec((tile_b, N_RAW), lambda i: (i, 0)),
            pl.BlockSpec((tile_b, N_EMB_FLAT), lambda i: (i, 0)),
            pl.BlockSpec((N_RAW, HID), lambda i: (0, 0)),
            pl.BlockSpec((N_EMB_FLAT, HID), lambda i: (0, 0)),
            pl.BlockSpec((1, HID), lambda i: (0, 0)),
        ],
        out_specs=(
            pl.BlockSpec((tile_b, HID), lambda i: (i, 0)),
            pl.BlockSpec((1, 8, HID), lambda i: (i, 0, 0)),   # per-tile partials
            pl.BlockSpec((1, 8, HID), lambda i: (i, 0, 0)),
        ),
        compiler_params=pltpu.CompilerParams(
            dimension_semantics=("parallel",),                # megacore on v7x
            vmem_limit_bytes=VMEM_LIMIT_BYTES),
    )(x_bf, emb_flat, pp["w1a"], pp["w1b"], pp["b1"])

    # tiny BN finalize in f32 ([1,128]): reduce partials, fold gamma/beta
    mean = jnp.sum(ssum[:, 0, :], axis=0, keepdims=True) / B
    var = jnp.sum(ssq[:, 0, :], axis=0, keepdims=True) / B - mean * mean
    inv = jax.lax.rsqrt(var + BN_EPS)
    bn_scale = pp["gamma"] * inv
    bn_shift = pp["beta"] - mean * bn_scale

    def p2_kernel(h_ref, s_ref, t_ref, w2_ref, b2_ref, o_ref):
        r = jnp.maximum(h_ref[...].astype(jnp.float32) * s_ref[...] + t_ref[...], 0.0)
        out = jax.lax.dot_general(w2_ref[...], r, (((1,), (1,)), ((), ())),
                                  preferred_element_type=jnp.float32)   # [8, tile_b]
        o_ref[...] = out[0:1, :] + b2_ref[...]                           # (1, tile_b)

    return pl.pallas_call(
        p2_kernel,
        out_shape=jax.ShapeDtypeStruct((1, b_pad), jnp.float32),
        grid=(num_tiles,),
        in_specs=[
            pl.BlockSpec((tile_b, HID), lambda i: (i, 0)),
            pl.BlockSpec((1, HID), lambda i: (0, 0)),
            pl.BlockSpec((1, HID), lambda i: (0, 0)),
            pl.BlockSpec((8, HID), lambda i: (0, 0)),
            pl.BlockSpec((1, 1), lambda i: (0, 0)),
        ],
        out_specs=pl.BlockSpec((1, tile_b), lambda i: (0, i)),
        compiler_params=pltpu.CompilerParams(
            dimension_semantics=("parallel",),
            vmem_limit_bytes=VMEM_LIMIT_BYTES),
    )(h, bn_scale, bn_shift, pp["w2_pad"], pp["b2"])


@functools.partial(jax.jit, static_argnames=("force_two_pass",))
def dnn_forward(x, pp, force_two_pass=False):
    B = x.shape[0]

    # categorical path: gather champion ids (round, not truncate), embed (bf16)
    champ_ids = jnp.round(x[:, CHAMPION_INDICES]).astype(jnp.int32)           # [B, 10]
    emb_flat = jnp.take(pp["emb"], champ_ids, axis=0).reshape(B, N_EMB_FLAT)  # [B, 80] bf16
    # TODO(synk): in-kernel embedding gather (VMEM-resident table) skipped; the
    # [B,80] bf16 slab is the only remaining intermediate HBM traffic.
    # non-categorical path: column mask + normalization are folded into w1a/b1,
    # so the raw input feeds the kernel directly (just a bf16 cast).
    x_bf = x.astype(jnp.bfloat16)                                             # [B, 203] bf16
    # TODO(synk): the reference forward's debug print loops and BatchNorm1d
    # running_mean/running_var updates (training side effects) are omitted.

    # batch tiling: multiple of 16 rows (bf16 sublane packing), padded with zeros
    if B <= TILE_B_MAX:
        tile_b = -(-B // 16) * 16
    else:
        tile_b = TILE_B_MAX
    num_tiles = -(-B // tile_b)
    b_pad = num_tiles * tile_b
    if b_pad != B:
        x_bf = jnp.pad(x_bf, ((0, b_pad - B), (0, 0)))
        emb_flat = jnp.pad(emb_flat, ((0, b_pad - B), (0, 0)))

    if (b_pad <= FUSED_MAX_B) and (not force_two_pass):
        out_row = _forward_fused(x_bf, emb_flat, pp, B, tile_b, num_tiles, b_pad)
    else:
        out_row = _forward_two_pass(x_bf, emb_flat, pp, B, tile_b, num_tiles, b_pad)

    return out_row[0, :B].reshape(B, 1)


def dnn_reference(x, params):
    """Pure-JAX f32 reference matching the PyTorch forward (no prints)."""
    B = x.shape[0]
    champ_ids = jnp.round(x[:, CHAMPION_INDICES]).astype(jnp.int32)
    emb = params["emb"][champ_ids].reshape(B, N_EMB_FLAT)
    x_nc = x[:, NON_CHAMP_IDX] * NORM_SCALE_NP[None, :] + NORM_SHIFT_NP[None, :]
    xf = jnp.concatenate([x_nc, emb], axis=1)
    h = xf @ params["w1"]
    mean = jnp.mean(h, axis=0, keepdims=True)
    var = jnp.mean((h - mean) ** 2, axis=0, keepdims=True)      # biased (training BN)
    hn = (h - mean) * jax.lax.rsqrt(var + BN_EPS) * params["gamma"] + params["beta"]
    return jnp.maximum(hn, 0.0) @ params["w2"] + params["b2"]


if __name__ == "__main__":
    key = jax.random.PRNGKey(0)
    k_params, k_x1, k_c1, k_x2, k_c2 = jax.random.split(key, 5)

    params = init_params(k_params)
    pp = prepare_params(params)

    def make_input(kx, kc, batch):
        x = jax.random.uniform(kx, (batch, N_RAW), jnp.float32, 0.0, 100.0)
        champ_vals = jax.random.randint(kc, (batch, N_CHAMP), 0, NUM_EMB).astype(jnp.float32)
        return x.at[:, CHAMPION_INDICES].set(champ_vals)

    # primary fused single-kernel path
    x1 = make_input(k_x1, k_c1, 4)
    out1 = dnn_forward(x1, pp)
    jax.block_until_ready(out1)
    assert out1.shape == (4, 1) and out1.dtype == jnp.float32
    ref1 = dnn_reference(x1, params)
    assert float(jnp.max(jnp.abs(out1 - ref1))) < 0.15  # bf16 vs f32 reference

    # large-batch two-call fallback path (forced; also exercises pad masking)
    x2 = make_input(k_x2, k_c2, 37)
    out2 = dnn_forward(x2, pp, force_two_pass=True)
    jax.block_until_ready(out2)
    assert out2.shape == (37, 1) and out2.dtype == jnp.float32
    ref2 = dnn_reference(x2, params)
    assert float(jnp.max(jnp.abs(out2 - ref2))) < 0.15

    print("KERNEL_OK")
</pallas_src>

<mosaic_0001>
module attributes {stable_mosaic.version = 11 : i64} {
  func.func @kernel(%arg0: i32, %arg1: i32, %arg2: memref<16x203xbf16, #tpu.memory_space<vmem>>, %arg3: memref<16x80xbf16, #tpu.memory_space<vmem>>, %arg4: memref<203x128xbf16, #tpu.memory_space<vmem>>, %arg5: memref<80x128xbf16, #tpu.memory_space<vmem>>, %arg6: memref<1x128xf32, #tpu.memory_space<vmem>>, %arg7: memref<1x128xf32, #tpu.memory_space<vmem>>, %arg8: memref<1x128xf32, #tpu.memory_space<vmem>>, %arg9: memref<8x128xf32, #tpu.memory_space<vmem>>, %arg10: memref<1x1xf32, #tpu.memory_space<vmem>>, %arg11: memref<1x16xf32, #tpu.memory_space<vmem>>, %arg12: memref<1x16x128xf32, #tpu.memory_space<vmem>>, %arg13: memref<1x128xf32, #tpu.memory_space<vmem>>, %arg14: memref<1x128xf32, #tpu.memory_space<vmem>>, %arg15: memref<1x128xf32, #tpu.memory_space<vmem>>, %arg16: memref<1x128xf32, #tpu.memory_space<vmem>>) attributes {dimension_semantics = [#tpu.dimension_semantics<arbitrary>, #tpu.dimension_semantics<arbitrary>], iteration_bounds = array<i64: 2, 1>, scalar_prefetch = 0 : i64, scratch_operands = 5 : i64, tpu.core_type = #tpu.core_type<tc>, window_params = [{transform_indices = @transform_0, window_bounds = array<i64: 16, 203>}, {transform_indices = @transform_1, window_bounds = array<i64: 16, 80>}, {pipeline_mode = #tpu.pipeline_mode<synchronous>, transform_indices = @transform_2, window_bounds = array<i64: 203, 128>}, {pipeline_mode = #tpu.pipeline_mode<synchronous>, transform_indices = @transform_3, window_bounds = array<i64: 80, 128>}, {pipeline_mode = #tpu.pipeline_mode<synchronous>, transform_indices = @transform_4, window_bounds = array<i64: 1, 128>}, {pipeline_mode = #tpu.pipeline_mode<synchronous>, transform_indices = @transform_5, window_bounds = array<i64: 1, 128>}, {pipeline_mode = #tpu.pipeline_mode<synchronous>, transform_indices = @transform_6, window_bounds = array<i64: 1, 128>}, {pipeline_mode = #tpu.pipeline_mode<synchronous>, transform_indices = @transform_7, window_bounds = array<i64: 8, 128>}, {pipeline_mode = #tpu.pipeline_mode<synchronous>, transform_indices = @transform_8, window_bounds = array<i64: 1, 1>}, {transform_indices = @transform_9, window_bounds = array<i64: 1, 16>}]} {
    %c0_i32 = arith.constant 0 : i32
    %0 = arith.cmpi eq, %arg0, %c0_i32 : i32
    %1 = arith.extui %0 : i1 to i32
    %c0_i32_0 = arith.constant 0 : i32
    %2 = arith.cmpi ne, %1, %c0_i32_0 : i32
    scf.if %2 {
      %c0_i32_2 = arith.constant 0 : i32
      %6 = arith.cmpi eq, %arg1, %c0_i32_2 : i32
      %7 = arith.extui %6 : i1 to i32
      %c0_i32_3 = arith.constant 0 : i32
      %8 = arith.cmpi ne, %7, %c0_i32_3 : i32
      scf.if %8 {
        %cst_27 = arith.constant 0.000000e+00 : f32
        %44 = vector.broadcast %cst_27 : f32 to vector<1x128xf32>
        %c0_28 = arith.constant 0 : index
        %c0_29 = arith.constant 0 : index
        %45 = vector.load %arg13[%c0_28, %c0_29] : memref<1x128xf32, #tpu.memory_space<vmem>>, vector<1x128xf32>
        tpu.vector_store %arg13[%c0_28, %c0_29], %44 {strides = array<i32>} : memref<1x128xf32, #tpu.memory_space<vmem>>, vector<1x128xf32>,
        %cst_30 = arith.constant 0.000000e+00 : f32
        %46 = vector.broadcast %cst_30 : f32 to vector<1x128xf32>
        %c0_31 = arith.constant 0 : index
        %c0_32 = arith.constant 0 : index
        %47 = vector.load %arg14[%c0_31, %c0_32] : memref<1x128xf32, #tpu.memory_space<vmem>>, vector<1x128xf32>
        tpu.vector_store %arg14[%c0_31, %c0_32], %46 {strides = array<i32>} : memref<1x128xf32, #tpu.memory_space<vmem>>, vector<1x128xf32>,
      } else {
      }
      %c0 = arith.constant 0 : index
      %c0_4 = arith.constant 0 : index
      %9 = vector.load %arg2[%c0, %c0_4] : memref<16x203xbf16, #tpu.memory_space<vmem>>, vector<16x203xbf16>
      %c0_5 = arith.constant 0 : index
      %c0_6 = arith.constant 0 : index
      %10 = vector.load %arg4[%c0_5, %c0_6] : memref<203x128xbf16, #tpu.memory_space<vmem>>, vector<203x128xbf16>
      %cst = arith.constant dense<0.000000e+00> : vector<16x128xf32>
      %11 = tpu.matmul %9, %10, %cst {dimension_numbers = #tpu.dot_dimension_numbers<[1], [0], [0], [1], [0, 0, 1, 1], [], []>} : vector<16x203xbf16>, vector<203x128xbf16>, vector<16x128xf32> -> vector<16x128xf32>
      %c0_7 = arith.constant 0 : index
      %c0_8 = arith.constant 0 : index
      %12 = vector.load %arg3[%c0_7, %c0_8] : memref<16x80xbf16, #tpu.memory_space<vmem>>, vector<16x80xbf16>
      %c0_9 = arith.constant 0 : index
      %c0_10 = arith.constant 0 : index
      %13 = vector.load %arg5[%c0_9, %c0_10] : memref<80x128xbf16, #tpu.memory_space<vmem>>, vector<80x128xbf16>
      %cst_11 = arith.constant dense<0.000000e+00> : vector<16x128xf32>
      %14 = tpu.matmul %12, %13, %cst_11 {dimension_numbers = #tpu.dot_dimension_numbers<[1], [0], [0], [1], [0, 0, 1, 1], [], []>} : vector<16x80xbf16>, vector<80x128xbf16>, vector<16x128xf32> -> vector<16x128xf32>
      %15 = arith.addf %11, %14 : vector<16x128xf32>
      %c0_12 = arith.constant 0 : index
      %c0_13 = arith.constant 0 : index
      %16 = vector.load %arg6[%c0_12, %c0_13] : memref<1x128xf32, #tpu.memory_space<vmem>>, vector<1x128xf32>
      %17 = vector.broadcast %16 : vector<1x128xf32> to vector<16x128xf32>
      %18 = arith.addf %15, %17 : vector<16x128xf32>
      %19 = tpu.iota {dimensions = array<i32: 0>} : vector<16x1xi32>
      %c16_i32 = arith.constant 16 : i32
      %20 = arith.muli %arg1, %c16_i32 : i32
      %21 = vector.broadcast %20 : i32 to vector<16x1xi32>
      %22 = arith.addi %19, %21 : vector<16x1xi32>
      %c4_i32 = arith.constant 4 : i32
      %23 = vector.broadcast %c4_i32 : i32 to vector<16x1xi32>
      %24 = arith.cmpi slt, %22, %23 : vector<16x1xi32>
      %cst_14 = arith.constant 0.000000e+00 : f32
      %25 = vector.shape_cast %24 : vector<16x1xi1> to vector<16x1xi1>
      %26 = vector.broadcast %25 : vector<16x1xi1> to vector<16x128xi1>
      %27 = vector.broadcast %cst_14 : f32 to vector<16x128xf32>
      %28 = arith.select %26, %18, %27 : vector<16x128xi1>, vector<16x128xf32>
      %c0_15 = arith.constant 0 : index
      %c0_16 = arith.constant 0 : index
      %29 = vector.load %arg13[%c0_15, %c0_16] : memref<1x128xf32, #tpu.memory_space<vmem>>, vector<1x128xf32>
      %cst_17 = arith.constant dense<0.000000e+00> : vector<128xf32>
      %30 = vector.multi_reduction <add>, %28, %cst_17 [0] : vector<16x128xf32> to vector<128xf32>
      %31 = vector.shape_cast %30 : vector<128xf32> to vector<1x128xf32>
      %32 = arith.addf %29, %31 : vector<1x128xf32>
      %c0_18 = arith.constant 0 : index
      %c0_19 = arith.constant 0 : index
      %33 = vector.load %arg13[%c0_18, %c0_19] : memref<1x128xf32, #tpu.memory_space<vmem>>, vector<1x128xf32>
      tpu.vector_store %arg13[%c0_18, %c0_19], %32 {strides = array<i32>} : memref<1x128xf32, #tpu.memory_space<vmem>>, vector<1x128xf32>,
      %c0_20 = arith.constant 0 : index
      %c0_21 = arith.constant 0 : index
      %34 = vector.load %arg14[%c0_20, %c0_21] : memref<1x128xf32, #tpu.memory_space<vmem>>, vector<1x128xf32>
      %35 = arith.mulf %28, %28 : vector<16x128xf32>
      %cst_22 = arith.constant dense<0.000000e+00> : vector<128xf32>
      %36 = vector.multi_reduction <add>, %35, %cst_22 [0] : vector<16x128xf32> to vector<128xf32>
      %37 = vector.shape_cast %36 : vector<128xf32> to vector<1x128xf32>
      %38 = arith.addf %34, %37 : vector<1x128xf32>
      %c0_23 = arith.constant 0 : index
      %c0_24 = arith.constant 0 : index
      %39 = vector.load %arg14[%c0_23, %c0_24] : memref<1x128xf32, #tpu.memory_space<vmem>>, vector<1x128xf32>
      tpu.vector_store %arg14[%c0_23, %c0_24], %38 {strides = array<i32>} : memref<1x128xf32, #tpu.memory_space<vmem>>, vector<1x128xf32>,
      %40 = arith.index_cast %arg1 : i32 to index
      %c0_25 = arith.constant 0 : index
      %c0_26 = arith.constant 0 : index
      %41 = vector.load %arg12[%40, %c0_25, %c0_26] : memref<1x16x128xf32, #tpu.memory_space<vmem>>, vector<1x16x128xf32>
      %42 = vector.shape_cast %41 : vector<1x16x128xf32> to vector<16x128xf32>
      %43 = vector.shape_cast %18 : vector<16x128xf32> to vector<1x16x128xf32>
      tpu.vector_store %arg12[%40, %c0_25, %c0_26], %43 {strides = array<i32>} : memref<1x16x128xf32, #tpu.memory_space<vmem>>, vector<1x16x128xf32>,
    } else {
    }
    %c1_i32 = arith.constant 1 : i32
    %3 = arith.cmpi eq, %arg0, %c1_i32 : i32
    %4 = arith.extui %3 : i1 to i32
    %c0_i32_1 = arith.constant 0 : i32
    %5 = arith.cmpi ne, %4, %c0_i32_1 : i32
    scf.if %5 {
      %c0_i32_2 = arith.constant 0 : i32
      %6 = arith.cmpi eq, %arg1, %c0_i32_2 : i32
      %7 = arith.extui %6 : i1 to i32
      %c0_i32_3 = arith.constant 0 : i32
      %8 = arith.cmpi ne, %7, %c0_i32_3 : i32
      scf.if %8 {
        %c0_16 = arith.constant 0 : index
        %c0_17 = arith.constant 0 : index
        %27 = vector.load %arg13[%c0_16, %c0_17] : memref<1x128xf32, #tpu.memory_space<vmem>>, vector<1x128xf32>
        %cst_18 = arith.constant 2.500000e-01 : f32
        %28 = vector.broadcast %cst_18 : f32 to vector<1x128xf32>
        %29 = arith.mulf %27, %28 : vector<1x128xf32>
        %c0_19 = arith.constant 0 : index
        %c0_20 = arith.constant 0 : index
        %30 = vector.load %arg14[%c0_19, %c0_20] : memref<1x128xf32, #tpu.memory_space<vmem>>, vector<1x128xf32>
        %cst_21 = arith.constant 2.500000e-01 : f32
        %31 = vector.broadcast %cst_21 : f32 to vector<1x128xf32>
        %32 = arith.mulf %30, %31 : vector<1x128xf32>
        %33 = arith.mulf %29, %29 : vector<1x128xf32>
        %34 = arith.subf %32, %33 : vector<1x128xf32>
        %cst_22 = arith.constant 9.99999974E-6 : f32
        %35 = vector.broadcast %cst_22 : f32 to vector<1x128xf32>
        %36 = arith.addf %34, %35 : vector<1x128xf32>
        %37 = math.rsqrt %36 : vector<1x128xf32>
        %c0_23 = arith.constant 0 : index
        %c0_24 = arith.constant 0 : index
        %38 = vector.load %arg7[%c0_23, %c0_24] : memref<1x128xf32, #tpu.memory_space<vmem>>, vector<1x128xf32>
        %39 = arith.mulf %38, %37 : vector<1x128xf32>
        %c0_25 = arith.constant 0 : index
        %c0_26 = arith.constant 0 : index
        %40 = vector.load %arg15[%c0_25, %c0_26] : memref<1x128xf32, #tpu.memory_space<vmem>>, vector<1x128xf32>
        tpu.vector_store %arg15[%c0_25, %c0_26], %39 {strides = array<i32>} : memref<1x128xf32, #tpu.memory_space<vmem>>, vector<1x128xf32>,
        %c0_27 = arith.constant 0 : index
        %c0_28 = arith.constant 0 : index
        %41 = vector.load %arg8[%c0_27, %c0_28] : memref<1x128xf32, #tpu.memory_space<vmem>>, vector<1x128xf32>
        %42 = arith.mulf %29, %39 : vector<1x128xf32>
        %43 = arith.subf %41, %42 : vector<1x128xf32>
        %c0_29 = arith.constant 0 : index
        %c0_30 = arith.constant 0 : index
        %44 = vector.load %arg16[%c0_29, %c0_30] : memref<1x128xf32, #tpu.memory_space<vmem>>, vector<1x128xf32>
        tpu.vector_store %arg16[%c0_29, %c0_30], %43 {strides = array<i32>} : memref<1x128xf32, #tpu.memory_space<vmem>>, vector<1x128xf32>,
      } else {
      }
      %9 = arith.index_cast %arg1 : i32 to index
      %c0 = arith.constant 0 : index
      %c0_4 = arith.constant 0 : index
      %10 = vector.load %arg12[%9, %c0, %c0_4] : memref<1x16x128xf32, #tpu.memory_space<vmem>>, vector<1x16x128xf32>
      %11 = vector.shape_cast %10 : vector<1x16x128xf32> to vector<16x128xf32>
      %c0_5 = arith.constant 0 : index
      %c0_6 = arith.constant 0 : index
      %12 = vector.load %arg15[%c0_5, %c0_6] : memref<1x128xf32, #tpu.memory_space<vmem>>, vector<1x128xf32>
      %13 = vector.broadcast %12 : vector<1x128xf32> to vector<16x128xf32>
      %14 = arith.mulf %11, %13 : vector<16x128xf32>
      %c0_7 = arith.constant 0 : index
      %c0_8 = arith.constant 0 : index
      %15 = vector.load %arg16[%c0_7, %c0_8] : memref<1x128xf32, #tpu.memory_space<vmem>>, vector<1x128xf32>
      %16 = vector.broadcast %15 : vector<1x128xf32> to vector<16x128xf32>
      %17 = arith.addf %14, %16 : vector<16x128xf32>
      %cst = arith.constant 0.000000e+00 : f32
      %18 = vector.broadcast %cst : f32 to vector<16x128xf32>
      %19 = arith.maximumf %17, %18 : vector<16x128xf32>
      %c0_9 = arith.constant 0 : index
      %c0_10 = arith.constant 0 : index
      %20 = vector.load %arg9[%c0_9, %c0_10] : memref<8x128xf32, #tpu.memory_space<vmem>>, vector<8x128xf32>
      %cst_11 = arith.constant dense<0.000000e+00> : vector<8x16xf32>
      %21 = tpu.matmul %20, %19, %cst_11 {dimension_numbers = #tpu.dot_dimension_numbers<[1], [1], [0], [0], [0, 0, 1, 0], [], []>} : vector<8x128xf32>, vector<16x128xf32>, vector<8x16xf32> -> vector<8x16xf32>
      %22 = vector.extract_strided_slice %21 {offsets = [0, 0], sizes = [1, 16], strides = [1, 1]} : vector<8x16xf32> to vector<1x16xf32>
      %c0_12 = arith.constant 0 : index
      %c0_13 = arith.constant 0 : index
      %23 = vector.load %arg10[%c0_12, %c0_13] : memref<1x1xf32, #tpu.memory_space<vmem>>, vector<1x1xf32>
      %24 = vector.broadcast %23 : vector<1x1xf32> to vector<1x16xf32>
      %25 = arith.addf %22, %24 : vector<1x16xf32>
      %c0_14 = arith.constant 0 : index
      %c0_15 = arith.constant 0 : index
      %26 = vector.load %arg11[%c0_14, %c0_15] : memref<1x16xf32, #tpu.memory_space<vmem>>, vector<1x16xf32>
      tpu.vector_store %arg11[%c0_14, %c0_15], %25 {strides = array<i32>} : memref<1x16xf32, #tpu.memory_space<vmem>>, vector<1x16xf32>,
    } else {
    }
    return
  }
  func.func @transform_0(%arg0: i32, %arg1: i32) -> (i32, i32) {
    %c1_i32 = arith.constant 1 : i32
    %0 = arith.subi %c1_i32, %arg0 : i32
    %1 = arith.muli %0, %arg1 : i32
    %c0_i32 = arith.constant 0 : i32
    %2 = arith.muli %arg0, %c0_i32 : i32
    %3 = arith.addi %1, %2 : i32
    %c0_i32_0 = arith.constant 0 : i32
    %c0_i32_1 = arith.constant 0 : i32
    return %3, %c0_i32_0 : i32, i32
  }
  func.func @transform_1(%arg0: i32, %arg1: i32) -> (i32, i32) {
    %c1_i32 = arith.constant 1 : i32
    %0 = arith.subi %c1_i32, %arg0 : i32
    %1 = arith.muli %0, %arg1 : i32
    %c0_i32 = arith.constant 0 : i32
    %2 = arith.muli %arg0, %c0_i32 : i32
    %3 = arith.addi %1, %2 : i32
    %c0_i32_0 = arith.constant 0 : i32
    %c0_i32_1 = arith.constant 0 : i32
    return %3, %c0_i32_0 : i32, i32
  }
  func.func @transform_2(%arg0: i32, %arg1: i32) -> (i32, i32) {
    %c0_i32 = arith.constant 0 : i32
    %c0_i32_0 = arith.constant 0 : i32
    %c0_i32_1 = arith.constant 0 : i32
    return %c0_i32, %c0_i32_0 : i32, i32
  }
  func.func @transform_3(%arg0: i32, %arg1: i32) -> (i32, i32) {
    %c0_i32 = arith.constant 0 : i32
    %c0_i32_0 = arith.constant 0 : i32
    %c0_i32_1 = arith.constant 0 : i32
    return %c0_i32, %c0_i32_0 : i32, i32
  }
  func.func @transform_4(%arg0: i32, %arg1: i32) -> (i32, i32) {
    %c0_i32 = arith.constant 0 : i32
    %c0_i32_0 = arith.constant 0 : i32
    %c0_i32_1 = arith.constant 0 : i32
    return %c0_i32, %c0_i32_0 : i32, i32
  }
  func.func @transform_5(%arg0: i32, %arg1: i32) -> (i32, i32) {
    %c0_i32 = arith.constant 0 : i32
    %c0_i32_0 = arith.constant 0 : i32
    %c0_i32_1 = arith.constant 0 : i32
    return %c0_i32, %c0_i32_0 : i32, i32
  }
  func.func @transform_6(%arg0: i32, %arg1: i32) -> (i32, i32) {
    %c0_i32 = arith.constant 0 : i32
    %c0_i32_0 = arith.constant 0 : i32
    %c0_i32_1 = arith.constant 0 : i32
    return %c0_i32, %c0_i32_0 : i32, i32
  }
  func.func @transform_7(%arg0: i32, %arg1: i32) -> (i32, i32) {
    %c0_i32 = arith.constant 0 : i32
    %c0_i32_0 = arith.constant 0 : i32
    %c0_i32_1 = arith.constant 0 : i32
    return %c0_i32, %c0_i32_0 : i32, i32
  }
  func.func @transform_8(%arg0: i32, %arg1: i32) -> (i32, i32) {
    %c0_i32 = arith.constant 0 : i32
    %c0_i32_0 = arith.constant 0 : i32
    %c0_i32_1 = arith.constant 0 : i32
    return %c0_i32, %c0_i32_0 : i32, i32
  }
  func.func @transform_9(%arg0: i32, %arg1: i32) -> (i32, i32) {
    %0 = arith.muli %arg0, %arg1 : i32
    %c0_i32 = arith.constant 0 : i32
    %c0_i32_0 = arith.constant 0 : i32
    return %c0_i32, %0 : i32, i32
  }
}

</mosaic_0001>

<llo_original>
// kernel: dnn_forward.1
$region0: #{dnn_forward.1}
  #allocation0 [shape = 'u32[]', space=smem, size = 0x4, offset = 0x4, fixed_abs, tag = 'smem constant byte address 0x4 - core index']
  #allocation1 [shape = 'u32[144,128]{1,0:T(1,128)}', space=vmem, size = 0x12000, scoped, tag = 'internal scratch']
  #allocation2 [shape = 'f32[1,16,128]{2,1,0:T(8,128)}', space=vmem, size = 0x2000, scoped, tag = 'scratch operand']
  #allocation3 [shape = 'f32[1,128]{1,0:T(1,128)}', space=vmem, size = 0x200, scoped, tag = 'scratch operand']
  #allocation4 [shape = 'f32[1,128]{1,0:T(1,128)}', space=vmem, size = 0x200, scoped, tag = 'scratch operand']
  #allocation5 [shape = 'f32[1,128]{1,0:T(1,128)}', space=vmem, size = 0x200, scoped, tag = 'scratch operand']
  #allocation6 [shape = 'f32[1,128]{1,0:T(1,128)}', space=vmem, size = 0x200, scoped, tag = 'scratch operand']
  #allocation7 [shape = 'f32[1,1]{1,0:T(1,128)S(1)}', space=vmem, size = 0x200, scoped, tag = 'scoped memory for dnn_forward.1']
  %s0 = inlined_call_operand.vmem [shape: bf16[16,203], index: 0, kind: input, shape index: {}]
  %s1 = inlined_call_operand.vmem [shape: bf16[16,80], index: 1, kind: input, shape index: {}]
  %s2 = inlined_call_operand.vmem [shape: bf16[203,128], index: 2, kind: input, shape index: {}]
  %s3 = inlined_call_operand.vmem [shape: bf16[80,128], index: 3, kind: input, shape index: {}]
  %s4 = inlined_call_operand.vmem [shape: f32[1,128], index: 4, kind: input, shape index: {}]
  %s5 = inlined_call_operand.vmem [shape: f32[1,128], index: 5, kind: input, shape index: {}]
  %s6 = inlined_call_operand.vmem [shape: f32[1,128], index: 6, kind: input, shape index: {}]
  %s7 = inlined_call_operand.vmem [shape: f32[8,128], index: 7, kind: input, shape index: {}]
  %s8 = inlined_call_operand.<no memory space> [shape: f32[1,1], index: 8, kind: input, shape index: {}]
  %s9 = inlined_call_operand.vmem [shape: f32[1,16], index: 9, kind: output, shape index: {}]
  %s10 = sld [smem:[#allocation0]]
  $region85: #{dnn_forward.1} parent=0
    _
  %s12 = ssub.s32 1, %s10
  %s13 = scalar_select 0, %s12, %s10
  %v14 = vstv %s8
  %15 = vst [vmem:[#allocation7] sm:$0x1] %v14
  loop: start=0, step=1, limit=4
  $region2: #{dnn_forward.1} parent=0 // loop_pre_header
    _
  $region3: #{dnn_forward.1} parent=0 // loop_header
    %s17 = sphi 0, %s21
    %p18 = scmp.ge.s32.totalorder %s17, 4
    %s24 = sphi 0, %s36
    %s25 = sphi 0, %s32
    %s26 = sphi 0, %s24
    %s27 = sphi 0, %s25
    %s28 = sphi 0, %s26
    %s29 = sphi 0, %s27
    %s43 = sphi 0, %s45
    %s46 = sphi 0, %s43
    %s47 = sphi 0, %s46
    %s63 = sphi 0, %s47
    %s73 = sphi 0, %s75
    %s76 = sphi 0, %s73
    %s77 = sphi 0, %s76
    %s93 = sphi 0, %s77
    %s97 = sphi 0, %s97
    %s99 = sphi 0, %s97
    %s100 = sphi 0, %s99
    %s114 = sphi 0, %s100
    %s118 = sphi 0, %s118
    %s120 = sphi 0, %s118
    %s121 = sphi 0, %s120
    %s135 = sphi 0, %s121
    %s139 = sphi 0, %s139
    %s141 = sphi 0, %s139
    %s142 = sphi 0, %s141
    %s156 = sphi 0, %s142
    %s160 = sphi 0, %s160
    %s162 = sphi 0, %s160
    %s163 = sphi 0, %s162
    %s177 = sphi 0, %s163
    %s181 = sphi 0, %s181
    %s183 = sphi 0, %s181
    %s184 = sphi 0, %s183
    %s198 = sphi 0, %s184
    %s202 = sphi 0, %s202
    %s204 = sphi 0, %s202
    %s205 = sphi 0, %s204
    %s219 = sphi 0, %s205
    %s223 = sphi 0, %s223
    %s225 = sphi 0, %s223
    %s226 = sphi 0, %s225
    %s240 = sphi 0, %s226
    %s248 = sphi 0, %s250
    %s251 = sphi 0, %s248
    %s252 = sphi 0, %s251
    %s268 = sphi 0, %s252
  $region4: #{dnn_forward.1} parent=0 // loop_header_branch
    %20 = sbr.rel (%p18) target = $region8
  $region5: #{dnn_forward.1} parent=0 // loop_body
    %s22 = ssub.s32 %s17, 1
    %s23 = ssub.s32 %s17, 2
    %s30 = sadd.s32 1, %s25
    %p31 = scmp.ge.s32.totalorder %s30, 1
    %s32 = scalar_select %p31, 0, %s30
    %s33 = sadd.s32 1, %s24
    %s34 = scalar_select %p31, %s33, %s24
    %p35 = scmp.ge.s32.totalorder %s34, 2
    %s36 = scalar_select %p35, 0, %s34
    %s37 = ssub.s32 1, %s24
    %s38 = smul.u32 %s37, %s25
    %s39 = ssub.s32 1, %s36
    %s40 = smul.u32 %s39, %s32
    %s41 = ssub.s32 %s38, %s40
    %p42 = scmp.eq.s32.totalorder %s41, 0
    %s44 = sadd.s32 %s43, 1
    %s45 = scalar_select %p42, %s43, %s44
    %p48 = pneg %p42
    %p49 = scmp.eq.s32.totalorder %s17, 1
    %p50 = por %p48, %p49
    %p51 = scmp.ne.s32.totalorder %s43, %s46
    %p52 = scmp.eq.s32.totalorder %s17, 0
    %p53 = por %p51, %p52
    %p54 = scmp.ne.s32.totalorder %s43, %s46
    %p55 = scmp.eq.s32.totalorder %s22, 1
    %p56 = por %p54, %p55
    %p57 = scmp.ne.s32.totalorder %s46, %s47
    %p58 = scmp.eq.s32.totalorder %s22, 0
    %p59 = por %p57, %p58
    %p60 = scmp.ne.s32.totalorder %s46, %s47
    %p61 = scmp.eq.s32.totalorder %s23, 1
    %p62 = por %p60, %p61
    %p64 = scmp.ne.s32.totalorder %s47, %s63
    %p65 = scmp.eq.s32.totalorder %s23, 0
    %p66 = por %p64, %p65
    %s67 = ssub.s32 1, %s24
    %s68 = smul.u32 %s67, %s25
    %s69 = ssub.s32 1, %s36
    %s70 = smul.u32 %s69, %s32
    %s71 = ssub.s32 %s68, %s70
    %p72 = scmp.eq.s32.totalorder %s71, 0
    %s74 = sadd.s32 %s73, 1
    %s75 = scalar_select %p72, %s73, %s74
    %p78 = pneg %p72
    %p79 = scmp.eq.s32.totalorder %s17, 1
    %p80 = por %p78, %p79
    %p81 = scmp.ne.s32.totalorder %s73, %s76
    %p82 = scmp.eq.s32.totalorder %s17, 0
    %p83 = por %p81, %p82
    %p84 = scmp.ne.s32.totalorder %s73, %s76
    %p85 = scmp.eq.s32.totalorder %s22, 1
    %p86 = por %p84, %p85
    %p87 = scmp.ne.s32.totalorder %s76, %s77
    %p88 = scmp.eq.s32.totalorder %s22, 0
    %p89 = por %p87, %p88
    %p90 = scmp.ne.s32.totalorder %s76, %s77
    %p91 = scmp.eq.s32.totalorder %s23, 1
    %p92 = por %p90, %p91
    %p94 = scmp.ne.s32.totalorder %s77, %s93
    %p95 = scmp.eq.s32.totalorder %s23, 0
    %p96 = por %p94, %p95
    %s98 = sadd.s32 %s97, 1
    %p101 = scmp.eq.s32.totalorder %s17, 1
    %p102 = scmp.ne.s32.totalorder %s97, %s99
    %p103 = scmp.eq.s32.totalorder %s17, 0
    %p104 = por %p102, %p103
    %p105 = scmp.ne.s32.totalorder %s97, %s99
    %p106 = scmp.eq.s32.totalorder %s22, 1
    %p107 = por %p105, %p106
    %p108 = scmp.ne.s32.totalorder %s99, %s100
    %p109 = scmp.eq.s32.totalorder %s22, 0
    %p110 = por %p108, %p109
    %p111 = scmp.ne.s32.totalorder %s99, %s100
    %p112 = scmp.eq.s32.totalorder %s23, 1
    %p113 = por %p111, %p112
    %p115 = scmp.ne.s32.totalorder %s100, %s114
    %p116 = scmp.eq.s32.totalorder %s23, 0
    %p117 = por %p115, %p116
    %s119 = sadd.s32 %s118, 1
    %p122 = scmp.eq.s32.totalorder %s17, 1
    %p123 = scmp.ne.s32.totalorder %s118, %s120
    %p124 = scmp.eq.s32.totalorder %s17, 0
    %p125 = por %p123, %p124
    %p126 = scmp.ne.s32.totalorder %s118, %s120
    %p127 = scmp.eq.s32.totalorder %s22, 1
    %p128 = por %p126, %p127
    %p129 = scmp.ne.s32.totalorder %s120, %s121
    %p130 = scmp.eq.s32.totalorder %s22, 0
    %p131 = por %p129, %p130
    %p132 = scmp.ne.s32.totalorder %s120, %s121
    %p133 = scmp.eq.s32.totalorder %s23, 1
    %p134 = por %p132, %p133
    %p136 = scmp.ne.s32.totalorder %s121, %s135
    %p137 = scmp.eq.s32.totalorder %s23, 0
    %p138 = por %p136, %p137
    %s140 = sadd.s32 %s139, 1
    %p143 = scmp.eq.s32.totalorder %s17, 1
    %p144 = scmp.ne.s32.totalorder %s139, %s141
    %p145 = scmp.eq.s32.totalorder %s17, 0
    %p146 = por %p144, %p145
    %p147 = scmp.ne.s32.totalorder %s139, %s141
    %p148 = scmp.eq.s32.totalorder %s22, 1
    %p149 = por %p147, %p148
    %p150 = scmp.ne.s32.totalorder %s141, %s142
    %p151 = scmp.eq.s32.totalorder %s22, 0
    %p152 = por %p150, %p151
    %p153 = scmp.ne.s32.totalorder %s141, %s142
    %p154 = scmp.eq.s32.totalorder %s23, 1
    %p155 = por %p153, %p154
    %p157 = scmp.ne.s32.totalorder %s142, %s156
    %p158 = scmp.eq.s32.totalorder %s23, 0
    %p159 = por %p157, %p158
    %s161 = sadd.s32 %s160, 1
    %p164 = scmp.eq.s32.totalorder %s17, 1
    %p165 = scmp.ne.s32.totalorder %s160, %s162
    %p166 = scmp.eq.s32.totalorder %s17, 0
    %p167 = por %p165, %p166
    %p168 = scmp.ne.s32.totalorder %s160, %s162
    %p169 = scmp.eq.s32.totalorder %s22, 1
    %p170 = por %p168, %p169
    %p171 = scmp.ne.s32.totalorder %s162, %s163
    %p172 = scmp.eq.s32.totalorder %s22, 0
    %p173 = por %p171, %p172
    %p174 = scmp.ne.s32.totalorder %s162, %s163
    %p175 = scmp.eq.s32.totalorder %s23, 1
    %p176 = por %p174, %p175
    %p178 = scmp.ne.s32.totalorder %s163, %s177
    %p179 = scmp.eq.s32.totalorder %s23, 0
    %p180 = por %p178, %p179
    %s182 = sadd.s32 %s181, 1
    %p185 = scmp.eq.s32.totalorder %s17, 1
    %p186 = scmp.ne.s32.totalorder %s181, %s183
    %p187 = scmp.eq.s32.totalorder %s17, 0
    %p188 = por %p186, %p187
    %p189 = scmp.ne.s32.totalorder %s181, %s183
    %p190 = scmp.eq.s32.totalorder %s22, 1
    %p191 = por %p189, %p190
    %p192 = scmp.ne.s32.totalorder %s183, %s184
    %p193 = scmp.eq.s32.totalorder %s22, 0
    %p194 = por %p192, %p193
    %p195 = scmp.ne.s32.totalorder %s183, %s184
    %p196 = scmp.eq.s32.totalorder %s23, 1
    %p197 = por %p195, %p196
    %p199 = scmp.ne.s32.totalorder %s184, %s198
    %p200 = scmp.eq.s32.totalorder %s23, 0
    %p201 = por %p199, %p200
    %s203 = sadd.s32 %s202, 1
    %p206 = scmp.eq.s32.totalorder %s17, 1
    %p207 = scmp.ne.s32.totalorder %s202, %s204
    %p208 = scmp.eq.s32.totalorder %s17, 0
    %p209 = por %p207, %p208
    %p210 = scmp.ne.s32.totalorder %s202, %s204
    %p211 = scmp.eq.s32.totalorder %s22, 1
    %p212 = por %p210, %p211
    %p213 = scmp.ne.s32.totalorder %s204, %s205
    %p214 = scmp.eq.s32.totalorder %s22, 0
    %p215 = por %p213, %p214
    %p216 = scmp.ne.s32.totalorder %s204, %s205
    %p217 = scmp.eq.s32.totalorder %s23, 1
    %p218 = por %p216, %p217
    %p220 = scmp.ne.s32.totalorder %s205, %s219
    %p221 = scmp.eq.s32.totalorder %s23, 0
    %p222 = por %p220, %p221
    %s224 = sadd.s32 %s223, 1
    %p227 = scmp.eq.s32.totalorder %s17, 1
    %p228 = scmp.ne.s32.totalorder %s223, %s225
    %p229 = scmp.eq.s32.totalorder %s17, 0
    %p230 = por %p228, %p229
    %p231 = scmp.ne.s32.totalorder %s223, %s225
    %p232 = scmp.eq.s32.totalorder %s22, 1
    %p233 = por %p231, %p232
    %p234 = scmp.ne.s32.totalorder %s225, %s226
    %p235 = scmp.eq.s32.totalorder %s22, 0
    %p236 = por %p234, %p235
    %p237 = scmp.ne.s32.totalorder %s225, %s226
    %p238 = scmp.eq.s32.totalorder %s23, 1
    %p239 = por %p237, %p238
    %p241 = scmp.ne.s32.totalorder %s226, %s240
    %p242 = scmp.eq.s32.totalorder %s23, 0
    %p243 = por %p241, %p242
    %s244 = smul.u32 %s24, %s25
    %s245 = smul.u32 %s36, %s32
    %s246 = ssub.s32 %s244, %s245
    %p247 = scmp.eq.s32.totalorder %s246, 0
    %s249 = sadd.s32 %s248, 1
    %s250 = scalar_select %p247, %s248, %s249
    %p253 = pneg %p247
    %p254 = scmp.eq.s32.totalorder %s17, 1
    %p255 = por %p253, %p254
    %p256 = scmp.ne.s32.totalorder %s248, %s251
    %p257 = scmp.eq.s32.totalorder %s17, 0
    %p258 = por %p256, %p257
    %p259 = scmp.ne.s32.totalorder %s248, %s251
    %p260 = scmp.eq.s32.totalorder %s22, 1
    %p261 = por %p259, %p260
    %p262 = scmp.ne.s32.totalorder %s251, %s252
    %p263 = scmp.eq.s32.totalorder %s22, 0
    %p264 = por %p262, %p263
    %p265 = scmp.ne.s32.totalorder %s251, %s252
    %p266 = scmp.eq.s32.totalorder %s23, 1
    %p267 = por %p265, %p266
    %p269 = scmp.ne.s32.totalorder %s252, %s268
    %p270 = scmp.eq.s32.totalorder %s23, 0
    %p271 = por %p269, %p270
    %p272 = scmp.le.s32.totalorder 1, %s17
    %p273 = scmp.lt.s32.totalorder %s17, 3
    %p274 = pnand %p272, %p273
    %p275 = pneg %p274
    // Predicated region
    $region9: #{dnn_forward.1} parent=5 // pred_check
      _
    $region10: #{dnn_forward.1} parent=5 // pred_check_branch
      %277 = sbr.rel (%p274) target = $region12
    $region11: #{dnn_forward.1} parent=5 // pred_region
      %s278 = ssub.s32 %s17, 1
      // Predicated region
      $region13: #{dnn_forward.1} parent=11 // pred_check
        %p279 = pneg %p110
      $region14: #{dnn_forward.1} parent=11 // pred_check_branch
        %281 = sbr.rel (%p279) target = $region16
      $region15: #{dnn_forward.1} parent=11 // pred_region
        _
      $region16: #{dnn_forward.1} parent=11 // pred_fallthru
        _
      // Predicated region
      $region17: #{dnn_forward.1} parent=11 // pred_check
        %p282 = pneg %p131
      $region18: #{dnn_forward.1} parent=11 // pred_check_branch
        %284 = sbr.rel (%p282) target = $region20
      $region19: #{dnn_forward.1} parent=11 // pred_region
        _
      $region20: #{dnn_forward.1} parent=11 // pred_fallthru
        _
      // Predicated region
      $region21: #{dnn_forward.1} parent=11 // pred_check
        %p285 = pneg %p152
      $region22: #{dnn_forward.1} parent=11 // pred_check_branch
        %287 = sbr.rel (%p285) target = $region24
      $region23: #{dnn_forward.1} parent=11 // pred_region
        _
      $region24: #{dnn_forward.1} parent=11 // pred_fallthru
        _
      // Predicated region
      $region25: #{dnn_forward.1} parent=11 // pred_check
        %p288 = pneg %p173
      $region26: #{dnn_forward.1} parent=11 // pred_check_branch
        %290 = sbr.rel (%p288) target = $region28
      $region27: #{dnn_forward.1} parent=11 // pred_region
        _
      $region28: #{dnn_forward.1} parent=11 // pred_fallthru
        _
      // Predicated region
      $region29: #{dnn_forward.1} parent=11 // pred_check
        %p291 = pneg %p194
      $region30: #{dnn_forward.1} parent=11 // pred_check_branch
        %293 = sbr.rel (%p291) target = $region32
      $region31: #{dnn_forward.1} parent=11 // pred_region
        _
      $region32: #{dnn_forward.1} parent=11 // pred_fallthru
        _
      // Predicated region
      $region33: #{dnn_forward.1} parent=11 // pred_check
        %p294 = pneg %p215
      $region34: #{dnn_forward.1} parent=11 // pred_check_branch
        %296 = sbr.rel (%p294) target = $region36
      $region35: #{dnn_forward.1} parent=11 // pred_region
        _
      $region36: #{dnn_forward.1} parent=11 // pred_fallthru
        _
      // Predicated region
      $region37: #{dnn_forward.1} parent=11 // pred_check
        %p297 = pneg %p236
      $region38: #{dnn_forward.1} parent=11 // pred_check_branch
        %299 = sbr.rel (%p297) target = $region40
      $region39: #{dnn_forward.1} parent=11 // pred_region
        _
      $region40: #{dnn_forward.1} parent=11 // pred_fallthru
        _
    $region12: #{dnn_forward.1} parent=5 // pred_fallthru
      _
    %p300 = scmp.lt.s32.totalorder %s17, 2
    // Predicated region
    $region41: #{dnn_forward.1} parent=5 // pred_check
      %p301 = pneg %p300
    $region42: #{dnn_forward.1} parent=5 // pred_check_branch
      %303 = sbr.rel (%p301) target = $region44
    $region43: #{dnn_forward.1} parent=5 // pred_region
      // Predicated region
      $region45: #{dnn_forward.1} parent=43 // pred_check
        %p304 = pneg %p53
      $region46: #{dnn_forward.1} parent=43 // pred_check_branch
        %306 = sbr.rel (%p304) target = $region48
      $region47: #{dnn_forward.1} parent=43 // pred_region
        %s307 = ssub.s32 1, %s24
        %s308 = smul.u32 %s307, %s25
        %s309 = smul.u32 2, %s308
        %p310 = scmp.lt.s32.totalorder %s309, 1
        %s311 = scalar_select %p310, %s309, 1
        %s312 = smul.addr %s311, 2
        %s313 = smul.addr %s312, 4
        %s314 = scalar_lea.vmem %s0, %s313
        %s315 = ssub.s32 1, %s24
        %s316 = smul.u32 %s315, %s25
        %s317 = smul.u32 2, %s316
      $region48: #{dnn_forward.1} parent=43 // pred_fallthru
        _
      // Predicated region
      $region49: #{dnn_forward.1} parent=43 // pred_check
        %p318 = pneg %p83
      $region50: #{dnn_forward.1} parent=43 // pred_check_branch
        %320 = sbr.rel (%p318) target = $region52
      $region51: #{dnn_forward.1} parent=43 // pred_region
        %s321 = ssub.s32 1, %s24
        %s322 = smul.u32 %s321, %s25
        %s323 = smul.u32 2, %s322
        %p324 = scmp.lt.s32.totalorder %s323, 1
        %s325 = scalar_select %p324, %s323, 1
        %s326 = smul.addr %s325, 4
        %s327 = scalar_lea.vmem %s1, %s326
        %s328 = ssub.s32 1, %s24
        %s329 = smul.u32 %s328, %s25
        %s330 = smul.u32 2, %s329
      $region52: #{dnn_forward.1} parent=43 // pred_fallthru
        _
    $region44: #{dnn_forward.1} parent=5 // pred_fallthru
      _
    %p331 = scmp.le.s32.totalorder 1, %s17
    %p332 = scmp.lt.s32.totalorder %s17, 3
    %p333 = pnand %p331, %p332
    %p334 = pneg %p333
    // Predicated region
    $region53: #{dnn_forward.1} parent=5 // pred_check
      _
    $region54: #{dnn_forward.1} parent=5 // pred_check_branch
      %336 = sbr.rel (%p333) target = $region56
    $region55: #{dnn_forward.1} parent=5 // pred_region
      %s337 = ssub.s32 %s17, 1
      %s338 = ssub.s32 1, %s26
      %s339 = smul.u32 %s338, %s27
      %s340 = smul.u32 2, %s339
      %p341 = scmp.lt.s32.totalorder %s340, 1
      %s342 = scalar_select %p341, %s340, 1
      %s343 = smul.addr %s342, 2
      %s344 = smul.addr %s343, 4
      %s345 = scalar_lea.vmem %s0, %s344
      %p346 = pneg %p59
      %p347 = pneg %p56
      %s348 = ssub.s32 1, %s26
      %s349 = smul.u32 %s348, %s27
      %s350 = smul.u32 2, %s349
      %p351 = scmp.lt.s32.totalorder %s350, 1
      %s352 = scalar_select %p351, %s350, 1
      %s353 = smul.addr %s352, 4
      %s354 = scalar_lea.vmem %s1, %s353
      %p355 = pneg %p89
      %p356 = pneg %p86
      %p357 = pneg %p110
      %p358 = pneg %p107
      %p359 = pneg %p131
      %p360 = pneg %p128
      %p361 = pneg %p152
      %p362 = pneg %p149
      %p363 = pneg %p173
      %p364 = pneg %p170
      %p365 = pneg %p194
      %p366 = pneg %p191
      %p367 = pneg %p215
      %p368 = pneg %p212
      %p369 = pneg %p236
      %p370 = pneg %p233
      %p371 = pneg %p264
      %p372 = pneg %p261
      %s373 = smul.u32 %s26, %s27
      %p374 = scmp.lt.s32.totalorder %s373, 0
      %s375 = scalar_select %p374, %s373, 0
      %s376 = scalar_lea.vmem %s9, %s375
      %s377 = ssub.s32 1, %s26
      %s378 = smul.u32 %s377, %s27
      %s379 = smul.u32 2, %s378
      %p380 = scmp.lt.s32.totalorder %s379, 1
      %s381 = scalar_select %p380, %s379, 1
      %s382 = smul.addr %s381, 2
      %s383 = smul.addr %s382, 4
      %s384 = scalar_lea.vmem %s0, %s383
      %s385 = ssub.s32 1, %s26
      %s386 = smul.u32 %s385, %s27
      %s387 = smul.u32 2, %s386
      %s388 = ssub.s32 1, %s26
      %s389 = smul.u32 %s388, %s27
      %s390 = smul.u32 2, %s389
      %p391 = scmp.lt.s32.totalorder %s390, 1
      %s392 = scalar_select %p391, %s390, 1
      %s393 = smul.addr %s392, 4
      %s394 = scalar_lea.vmem %s1, %s393
      %s395 = ssub.s32 1, %s26
      %s396 = smul.u32 %s395, %s27
      %s397 = smul.u32 2, %s396
      %s398 = smul.u32 %s26, %s27
      %p399 = scmp.lt.s32.totalorder %s398, 0
      %s400 = scalar_select %p399, %s398, 0
      %s401 = scalar_lea.vmem %s9, %s400
      %s402 = smul.u32 %s26, %s27
      %p404 = scmp.eq.s32.totalorder %s26, 0
      // Predicated region
      $region57: #{dnn_forward.1} parent=55 // pred_check
        %p405 = pneg %p404
      $region58: #{dnn_forward.1} parent=55 // pred_check_branch
        %407 = sbr.rel (%p405) target = $region60
      $region59: #{dnn_forward.1} parent=55 // pred_region
        %p408 = scmp.eq.s32.totalorder %s27, 0
        // Predicated region
        $region61: #{dnn_forward.1} parent=59 // pred_check
          %p409 = pneg %p408
        $region62: #{dnn_forward.1} parent=59 // pred_check_branch
          %411 = sbr.rel (%p409) target = $region64
        $region63: #{dnn_forward.1} parent=59 // pred_region
          %412 = vst [vmem:[#allocation3] sm:$0x1] 0.0
          %413 = vst [vmem:[#allocation4] sm:$0x1] 0.0
        $region64: #{dnn_forward.1} parent=59 // pred_fallthru
          _
        %v414 = vld [vmem:[%s384] sm:$0xff]
        %v415 = vld [vmem:[%s384 + $0x8] sm:$0xff]
        %v416 = vld [vmem:[%s2] sm:$0xf]
        %v417 = vld [vmem:[%s2 + $0x4] sm:$0xf]
        %v418 = vld [vmem:[%s2 + $0x8] sm:$0xf]
        %v419 = vld [vmem:[%s2 + $0xc] sm:$0xf]
        %v420 = vld [vmem:[%s2 + $0x10] sm:$0xf]
        %v421 = vld [vmem:[%s2 + $0x14] sm:$0xf]
        %v422 = vld [vmem:[%s2 + $0x18] sm:$0xf]
        %v423 = vld [vmem:[%s2 + $0x1c] sm:$0xf]
        %v424 = vld [vmem:[%s2 + $0x20] sm:$0xf]
        %v425 = vld [vmem:[%s2 + $0x24] sm:$0xf]
        %v426 = vld [vmem:[%s2 + $0x28] sm:$0xf]
        %v427 = vld [vmem:[%s2 + $0x2c] sm:$0xf]
        %v428 = vld [vmem:[%s2 + $0x30] sm:$0xf]
        %v429 = vld [vmem:[%s2 + $0x34] sm:$0xf]
        %v430 = vld [vmem:[%s2 + $0x38] sm:$0xf]
        %v431 = vld [vmem:[%s2 + $0x3c] sm:$0xf]
        %v432 = vld [vmem:[%s2 + $0x40] sm:$0xf]
        %v433 = vld [vmem:[%s2 + $0x44] sm:$0xf]
        %v434 = vld [vmem:[%s2 + $0x48] sm:$0xf]
        %v435 = vld [vmem:[%s2 + $0x4c] sm:$0xf]
        %v436 = vld [vmem:[%s2 + $0x50] sm:$0xf]
        %v437 = vld [vmem:[%s2 + $0x54] sm:$0xf]
        %v438 = vld [vmem:[%s2 + $0x58] sm:$0xf]
        %v439 = vld [vmem:[%s2 + $0x5c] sm:$0xf]
        %v440 = vld [vmem:[%s2 + $0x60] sm:$0xf]
        %v441 = vld [vmem:[%s2 + $0x64] sm:$0x3]
        %v442 = vld [vmem:[%s394] sm:$0xf]
        %v443 = vld [vmem:[%s394 + $0x4] sm:$0xf]
        %v444 = vld [vmem:[%s3] sm:$0xf]
        %v445 = vld [vmem:[%s3 + $0x4] sm:$0xf]
        %v446 = vld [vmem:[%s3 + $0x8] sm:$0xf]
        %v447 = vld [vmem:[%s3 + $0xc] sm:$0xf]
        %v448 = vld [vmem:[%s3 + $0x10] sm:$0xf]
        %v449 = vld [vmem:[%s3 + $0x14] sm:$0xf]
        %v450 = vld [vmem:[%s3 + $0x18] sm:$0xf]
        %v451 = vld [vmem:[%s3 + $0x1c] sm:$0xf]
        %v452 = vld [vmem:[%s3 + $0x20] sm:$0xf]
        %v453 = vld [vmem:[%s3 + $0x24] sm:$0xf]
        %v456 = vunpack.c.l.b16 %v442
        %v457 = vunpack.c.l.b16 %v443
        %v458 = vpack.c.b16 %v457, %v456
        %v469 = vunpack.c.l.b16 %v444
        %v470 = vunpack.c.l.b16 %v445
        %v471 = vunpack.c.l.b16 %v446
        %v472 = vunpack.c.l.b16 %v447
        %v473 = vunpack.c.l.b16 %v448
        %v474 = vunpack.c.l.b16 %v449
        %v475 = vunpack.c.l.b16 %v450
        %v476 = vunpack.c.l.b16 %v451
        %v477 = vunpack.c.l.b16 %v452
        %v478 = vunpack.c.l.b16 %v453
        %v479 = vpack.c.b16 %v470, %v469
        %v480 = vpack.c.b16 %v472, %v471
        %v481 = vpack.c.b16 %v474, %v473
        %v482 = vpack.c.b16 %v476, %v475
        %v483 = vpack.c.b16 %v478, %v477
        %vm489 = vcmask 654336
        %v491 = vsel %vm489, %v458, 0
        %493 = vmatprep.subr.bf16.mxu0 0
        %494 = vmatpush1.bf16.msra.mxu0 %v479
        %495 = vmatprep.subr.bf16.mxu0 0
        %496 = vmatpush1.bf16.msra.mxu0 %v480
        %497 = vmatprep.subr.bf16.mxu0 0
        %498 = vmatpush1.bf16.msra.mxu0 %v481
        %499 = vmatprep.subr.bf16.mxu0 0
        %500 = vmatpush1.bf16.msra.mxu0 %v482
        %501 = vmatprep.subr.bf16.mxu0 0
        %502 = vmatpush1.bf16.msra.mxu0 %v483
        %503 = vmatprep.subr.bf16.mxu0 0
        %504 = vmatpush1.bf16.msra.mxu0 0
        %505 = vmatprep.subr.bf16.mxu0 0
        %506 = vmatpush1.bf16.msra.mxu0 0
        %507 = vmatprep.subr.bf16.mxu0 0
        %508 = vmatpush1.bf16.msra.mxu0 0
        %509 = vmatprep.subr.bf16.mxu0 0
        %510 = vmatpush1.bf16.msra.mxu0 0
        %511 = vmatprep.subr.bf16.mxu0 0
        %512 = vmatpush1.bf16.msra.mxu0 0
        %513 = vmatprep.subr.bf16.mxu0 0
        %514 = vmatpush1.bf16.msra.mxu0 0
        %515 = vmatprep.subr.bf16.mxu0 0
        %516 = vmatpush1.bf16.msra.mxu0 0
        %517 = vmatprep.subr.bf16.mxu0 0
        %518 = vmatpush1.bf16.msra.mxu0 0
        %519 = vmatprep.subr.bf16.mxu0 0
        %520 = vmatpush1.bf16.msra.mxu0 0
        %521 = vmatprep.subr.bf16.mxu0 0
        %522 = vmatpush1.bf16.msra.mxu0 0
        %523 = vmatprep.subr.bf16.mxu0 0
        %524 = vmatpush1.bf16.msra.mxu0 0
        %525 = vmatprep.mubr.bf16.mxu0 0
        %526 = vmatmul.mubr.bf16.gmra.mrb[0].mxu0 %v491
        %v527 = vpop.f32.mrb[0].mxu0
        %v528 = vadd.f32 0.0, %v527
        %v529 = vpop.f32.mrb[0].mxu0
        %v530 = vpop.f32.mrb[0].mxu0
        %v531 = vadd.f32 0.0, %v530
        %v532 = vpop.f32.mrb[0].mxu0
        %533 = vdwg.mxu0
        %v536 = vunpack.c.l.b16 %v414
        %v537 = vunpack.c.h.b16 %v414
        %v538 = vunpack.c.l.b16 %v415
        %v539 = vunpack.c.h.b16 %v415
        %v540 = vpack.c.b16 %v538, %v536
        %v541 = vpack.c.b16 %v539, %v537
        %v569 = vunpack.c.l.b16 %v416
        %v570 = vunpack.c.l.b16 %v417
        %v571 = vunpack.c.l.b16 %v418
        %v572 = vunpack.c.l.b16 %v419
        %v573 = vunpack.c.l.b16 %v420
        %v574 = vunpack.c.l.b16 %v421
        %v575 = vunpack.c.l.b16 %v422
        %v576 = vunpack.c.l.b16 %v423
        %v577 = vunpack.c.l.b16 %v424
        %v578 = vunpack.c.l.b16 %v425
        %v579 = vunpack.c.l.b16 %v426
        %v580 = vunpack.c.l.b16 %v427
        %v581 = vunpack.c.l.b16 %v428
        %v582 = vunpack.c.l.b16 %v429
        %v583 = vunpack.c.l.b16 %v430
        %v584 = vunpack.c.l.b16 %v431
        %v585 = vunpack.c.l.b16 %v432
        %v586 = vunpack.c.l.b16 %v433
        %v587 = vunpack.c.l.b16 %v434
        %v588 = vunpack.c.l.b16 %v435
        %v589 = vunpack.c.l.b16 %v436
        %v590 = vunpack.c.l.b16 %v437
        %v591 = vunpack.c.l.b16 %v438
        %v592 = vunpack.c.l.b16 %v439
        %v593 = vunpack.c.l.b16 %v440
        %v594 = vunpack.c.l.b16 %v441
        %v595 = vpack.c.b16 %v570, %v569
        %v596 = vpack.c.b16 %v572, %v571
        %v597 = vpack.c.b16 %v574, %v573
        %v598 = vpack.c.b16 %v576, %v575
        %v599 = vpack.c.b16 %v578, %v577
        %v600 = vpack.c.b16 %v580, %v579
        %v601 = vpack.c.b16 %v582, %v581
        %v602 = vpack.c.b16 %v584, %v583
        %v603 = vpack.c.b16 %v586, %v585
        %v604 = vpack.c.b16 %v588, %v587
        %v605 = vpack.c.b16 %v590, %v589
        %v606 = vpack.c.b16 %v592, %v591
        %v607 = vpack.c.b16 %v594, %v593
        %vm620 = vcmask 613376
        %v622 = vsel %vm620, %v541, 0
        %vm624 = vcmask 1044480
        %vm625 = vcmask 1045504
        %v626 = vsel %vm624, 4294967295, 65535
        %v627 = vsel %vm625, %v626, 0
        %v629 = vand.u32 %v607, %v627
        %631 = vmatprep.subr.bf16.mxu0 0
        %632 = vmatpush1.bf16.msra.mxu0 %v595
        %633 = vmatprep.subr.bf16.mxu0 0
        %634 = vmatpush1.bf16.msra.mxu0 %v596
        %635 = vmatprep.subr.bf16.mxu0 0
        %636 = vmatpush1.bf16.msra.mxu0 %v597
        %637 = vmatprep.subr.bf16.mxu0 0
        %638 = vmatpush1.bf16.msra.mxu0 %v598
        %639 = vmatprep.subr.bf16.mxu0 0
        %640 = vmatpush1.bf16.msra.mxu0 %v599
        %641 = vmatprep.subr.bf16.mxu0 0
        %642 = vmatpush1.bf16.msra.mxu0 %v600
        %643 = vmatprep.subr.bf16.mxu0 0
        %644 = vmatpush1.bf16.msra.mxu0 %v601
        %645 = vmatprep.subr.bf16.mxu0 0
        %646 = vmatpush1.bf16.msra.mxu0 %v602
        %647 = vmatprep.subr.bf16.mxu0 0
        %648 = vmatpush1.bf16.msra.mxu0 %v603
        %649 = vmatprep.subr.bf16.mxu0 0
        %650 = vmatpush1.bf16.msra.mxu0 %v604
        %651 = vmatprep.subr.bf16.mxu0 0
        %652 = vmatpush1.bf16.msra.mxu0 %v605
        %653 = vmatprep.subr.bf16.mxu0 0
        %654 = vmatpush1.bf16.msra.mxu0 %v606
        %655 = vmatprep.subr.bf16.mxu0 0
        %656 = vmatpush1.bf16.msra.mxu0 %v629
        %657 = vmatprep.subr.bf16.mxu0 0
        %658 = vmatpush1.bf16.msra.mxu0 0
        %659 = vmatprep.subr.bf16.mxu0 0
        %660 = vmatpush1.bf16.msra.mxu0 0
        %661 = vmatprep.subr.bf16.mxu0 0
        %662 = vmatpush1.bf16.msra.mxu0 0
        %663 = vmatprep.mubr.bf16.mxu0 %v622
        %664 = vmatmul.mubr.bf16.gmra.mrb[0].mxu0 %v540
        %v665 = vpop.f32.mrb[0].mxu0
        %v666 = vadd.f32 %v528, %v665
        %v667 = vpop.f32.mrb[0].mxu0
        %v668 = vpop.f32.mrb[0].mxu0
        %v669 = vadd.f32 %v531, %v668
        %v670 = vpop.f32.mrb[0].mxu0
        %671 = vdwg.mxu0
        %v672 = vld [vmem:[%s4] sm:$0x1]
        %v674 = vlaneseq
        %v675 = vshrl.u32 %v674, 7
        %v676 = vsub.s32 0, %v675
        %v677 = vrot.slane %v672, %v676
        %v679 = vadd.f32 %v666, %v677
        %v680 = vadd.f32 %v669, %v677
        %v681 = vlaneseq
        %v682 = vshrl.u32 %v681, 7
        %v683 = vadd.s32 %v682, 8
        %s684 = smul.u32 %s27, 16
        %v685 = vstv %s684
        %v686 = vadd.s32 %v682, %v685
        %v687 = vadd.s32 %v683, %v685
        %vm688 = vcmp.lt.s32.totalorder %v686, 4
        %vm689 = vcmp.lt.s32.totalorder %v687, 4
        %v690 = vsel %vm688, 1, 0
        %v691 = vsel %vm689, 1, 0
        %vm692 = vcmp.eq.s32.totalorder %v690, 1
        %vm693 = vcmp.eq.s32.totalorder %v691, 1
        %v694 = vsel %vm692, %v679, 0.0
        %v695 = vsel %vm693, %v680, 0.0
        %v696 = vld [vmem:[#allocation3] sm:$0x1]
        %v697 = vadd.f32 %v694, %v695
        %v698 = vrot.slane %v697, 4
        %v699 = vadd.f32 %v697, %v698
        %v700 = vrot.slane %v699, 2
        %v701 = vadd.f32 %v699, %v700
        %v702 = vrot.slane %v701, 1
        %v703 = vadd.f32 %v701, %v702
        %v704 = vadd.f32 %v696, %v703
        %705 = vst [vmem:[#allocation3] sm:$0x1] %v704
        %v706 = vld [vmem:[#allocation4] sm:$0x1]
        %v707 = vmul.f32 %v694, %v694
        %v708 = vmul.f32 %v695, %v695
        %v709 = vadd.f32 %v707, %v708
        %v710 = vrot.slane %v709, 4
        %v711 = vadd.f32 %v709, %v710
        %v712 = vrot.slane %v711, 2
        %v713 = vadd.f32 %v711, %v712
        %v714 = vrot.slane %v713, 1
        %v715 = vadd.f32 %v713, %v714
        %v716 = vadd.f32 %v706, %v715
        %717 = vst [vmem:[#allocation4] sm:$0x1] %v716
        %s718 = scalar_lea.vmem [#allocation2], %s684
        %719 = vst [vmem:[%s718] sm:$0xff] %v679
        %720 = vst [vmem:[%s718 + $0x8] sm:$0xff] %v680
      $region60: #{dnn_forward.1} parent=55 // pred_fallthru
        _
      %p721 = scmp.eq.s32.totalorder %s26, 1
      // Predicated region
      $region65: #{dnn_forward.1} parent=55 // pred_check
        %p722 = pneg %p721
      $region66: #{dnn_forward.1} parent=55 // pred_check_branch
        %724 = sbr.rel (%p722) target = $region68
      $region67: #{dnn_forward.1} parent=55 // pred_region
        %p725 = scmp.eq.s32.totalorder %s27, 0
        // Predicated region
        $region69: #{dnn_forward.1} parent=67 // pred_check
          %p726 = pneg %p725
        $region70: #{dnn_forward.1} parent=67 // pred_check_branch
          %728 = sbr.rel (%p726) target = $region72
        $region71: #{dnn_forward.1} parent=67 // pred_region
          %v729 = vld [vmem:[#allocation3] sm:$0x1]
          %v730 = vmul.f32 %v729, 0.25
          %v731 = vld [vmem:[#allocation4] sm:$0x1]
          %v732 = vmul.f32 %v731, 0.25
          %v733 = vmul.f32 %v730, %v730
          %v734 = vsub.f32 %v732, %v733
          %v735 = vadd.f32 %v734, 1e-05
          %v736 = vrsqrt.pop %v735
          %v737 = vld [vmem:[%s5] sm:$0x1]
          %v738 = vmul.f32 %v737, %v736
          %739 = vst [vmem:[#allocation5] sm:$0x1] %v738
          %v740 = vld [vmem:[%s6] sm:$0x1]
          %v741 = vmul.f32 %v730, %v738
          %v742 = vsub.f32 %v740, %v741
          %743 = vst [vmem:[#allocation6] sm:$0x1] %v742
        $region72: #{dnn_forward.1} parent=67 // pred_fallthru
          _
        %s744 = smul.u32 %s27, 16
        %s745 = scalar_lea.vmem [#allocation2], %s744
        %v746 = vld [vmem:[%s745] sm:$0xff]
        %v747 = vld [vmem:[%s745 + $0x8] sm:$0xff]
        %v748 = vld [vmem:[#allocation5] sm:$0x1]
        %v750 = vlaneseq
        %v751 = vshrl.u32 %v750, 7
        %v752 = vsub.s32 0, %v751
        %v753 = vrot.slane %v748, %v752
        %v755 = vmul.f32 %v746, %v753
        %v756 = vmul.f32 %v747, %v753
        %v757 = vld [vmem:[#allocation6] sm:$0x1]
        %v759 = vlaneseq
        %v760 = vshrl.u32 %v759, 7
        %v761 = vsub.s32 0, %v760
        %v762 = vrot.slane %v757, %v761
        %v764 = vadd.f32 %v755, %v762
        %v765 = vadd.f32 %v756, %v762
        %v766 = vmax.f32 %v764, 0.0
        %v767 = vmax.f32 %v765, 0.0
        %v768 = vld [vmem:[%s7] sm:$0xff]
        %769 = vmatprep.subr.mxu0 0.0
        %770 = vmatpush1.xpose.msra.mxu0 %v766
        %771 = vmatprep.subr.mxu0 0.0
        %772 = vmatpush1.xpose.msra.mxu0 %v767
        %773 = vmatprep.subr.mxu0 0.0
        %774 = vmatpush1.xpose.msra.mxu0 0.0
        %775 = vmatprep.subr.mxu0 0.0
        %776 = vmatpush1.xpose.msra.mxu0 0.0
        %777 = vmatprep.subr.mxu0 0.0
        %778 = vmatpush1.xpose.msra.mxu0 0.0
        %779 = vmatprep.subr.mxu0 0.0
        %780 = vmatpush1.xpose.msra.mxu0 0.0
        %781 = vmatprep.subr.mxu0 0.0
        %782 = vmatpush1.xpose.msra.mxu0 0.0
        %783 = vmatprep.subr.mxu0 0.0
        %784 = vmatpush1.xpose.msra.mxu0 0.0
        %785 = vmatprep.subr.mxu0 0.0
        %786 = vmatpush1.xpose.msra.mxu0 0.0
        %787 = vmatprep.subr.mxu0 0.0
        %788 = vmatpush1.xpose.msra.mxu0 0.0
        %789 = vmatprep.subr.mxu0 0.0
        %790 = vmatpush1.xpose.msra.mxu0 0.0
        %791 = vmatprep.subr.mxu0 0.0
        %792 = vmatpush1.xpose.msra.mxu0 0.0
        %793 = vmatprep.subr.mxu0 0.0
        %794 = vmatpush1.xpose.msra.mxu0 0.0
        %795 = vmatprep.subr.mxu0 0.0
        %796 = vmatpush1.xpose.msra.mxu0 0.0
        %797 = vmatprep.subr.mxu0 0.0
        %798 = vmatpush1.xpose.msra.mxu0 0.0
        %799 = vmatprep.subr.mxu0 0.0
        %800 = vmatpush1.xpose.msra.mxu0 0.0
        %801 = vmatprep.subr.mxu0 0.0
        %802 = vmatpush1.xpose.msra.mxu0 0.0
        %803 = vmatprep.subr.mxu0 0.0
        %804 = vmatpush1.xpose.msra.mxu0 0.0
        %805 = vmatprep.subr.mxu0 0.0
        %806 = vmatpush1.xpose.msra.mxu0 0.0
        %807 = vmatprep.subr.mxu0 0.0
        %808 = vmatpush1.xpose.msra.mxu0 0.0
        %809 = vmatprep.subr.mxu0 0.0
        %810 = vmatpush1.xpose.msra.mxu0 0.0
        %811 = vmatprep.subr.mxu0 0.0
        %812 = vmatpush1.xpose.msra.mxu0 0.0
        %813 = vmatprep.subr.mxu0 0.0
        %814 = vmatpush1.xpose.msra.mxu0 0.0
        %815 = vmatprep.subr.mxu0 0.0
        %816 = vmatpush1.xpose.msra.mxu0 0.0
        %817 = vmatprep.subr.mxu0 0.0
        %818 = vmatpush1.xpose.msra.mxu0 0.0
        %819 = vmatprep.subr.mxu0 0.0
        %820 = vmatpush1.xpose.msra.mxu0 0.0
        %821 = vmatprep.subr.mxu0 0.0
        %822 = vmatpush1.xpose.msra.mxu0 0.0
        %823 = vmatprep.subr.mxu0 0.0
        %824 = vmatpush1.xpose.msra.mxu0 0.0
        %825 = vmatprep.subr.mxu0 0.0
        %826 = vmatpush1.xpose.msra.mxu0 0.0
        %827 = vmatprep.subr.mxu0 0.0
        %828 = vmatpush1.xpose.msra.mxu0 0.0
        %829 = vmatprep.subr.mxu0 0.0
        %830 = vmatpush1.xpose.msra.mxu0 0.0
        %831 = vmatprep.subr.mxu0 0.0
        %832 = vmatpush1.xpose.msra.mxu0 0.0
        %833 = vmatprep.mubr.f32.mxu0 0.0
        %834 = vmatmul.mubr.f32.gmra.mrb[0].mxu0 %v768
        %v835 = vpop.f32.mrb[0].mxu0
        %v836 = vadd.f32 0.0, %v835
        %v837 = vpop.f32.mrb[0].mxu0
        %838 = vdwg.mxu0
        %v839 = vld [vmem:[#allocation7] sm:$0x1]
        %841 = vset.pattern.permute.xlu0 0
        %842 = vperm.xlu0 %841, %v839
        %v843 = vpop.permute.xlu0 %842
        %v845 = vlaneseq
        %v846 = vshrl.u32 %v845, 7
        %v847 = vsub.s32 0, %v846
        %v848 = vrot.slane %v843, %v847
        %v849 = vadd.f32 %v836, %v848
        %vm850 = vcmask 122880
        %851 = vst.msk [vmem:[%s401] sm:$0x1] %vm850, %v849
      $region68: #{dnn_forward.1} parent=55 // pred_fallthru
        _
      %s852 = smul.u32 %s26, %s27
      %p853 = scmp.lt.s32.totalorder %s852, 0
      %s854 = scalar_select %p853, %s852, 0
      %s855 = scalar_lea.vmem %s9, %s854
      // Predicated region
      $region73: #{dnn_forward.1} parent=55 // pred_check
        %p856 = pneg %p261
      $region74: #{dnn_forward.1} parent=55 // pred_check_branch
        %858 = sbr.rel (%p856) target = $region76
      $region75: #{dnn_forward.1} parent=55 // pred_region
        %s859 = smul.u32 %s26, %s27
      $region76: #{dnn_forward.1} parent=55 // pred_fallthru
        _
    $region56: #{dnn_forward.1} parent=5 // pred_fallthru
      _
    %p860 = scmp.le.s32.totalorder 2, %s17
    // Predicated region
    $region77: #{dnn_forward.1} parent=5 // pred_check
      %p861 = pneg %p860
    $region78: #{dnn_forward.1} parent=5 // pred_check_branch
      %863 = sbr.rel (%p861) target = $region80
    $region79: #{dnn_forward.1} parent=5 // pred_region
      %s864 = ssub.s32 %s17, 2
      // Predicated region
      $region81: #{dnn_forward.1} parent=79 // pred_check
        %p865 = pneg %p267
      $region82: #{dnn_forward.1} parent=79 // pred_check_branch
        %867 = sbr.rel (%p865) target = $region84
      $region83: #{dnn_forward.1} parent=79 // pred_region
        %s868 = smul.u32 %s28, %s29
        %p869 = scmp.lt.s32.totalorder %s868, 0
        %s870 = scalar_select %p869, %s868, 0
        %s871 = scalar_lea.vmem %s9, %s870
      $region84: #{dnn_forward.1} parent=79 // pred_fallthru
        _
    $region80: #{dnn_forward.1} parent=5 // pred_fallthru
      _
  $region6: #{dnn_forward.1} parent=0 // loop_footer
    %s21 = sadd.s32 1, %s17
  $region7: #{dnn_forward.1} parent=0 // loop_footer_branch
    %16 = sbr.rel target = $region3
  $region8: #{dnn_forward.1} parent=0 // loop_exit
    _

</llo_original>
